<compile_context>
chip_gen: v7x
topology: tpu7x:2x2x1
jax: 0.10.0
libtpu: 0.0.40
codegen_flags: <defaults>
</compile_context>

<pallas_src>
import functools

import jax
import jax.numpy as jnp
from jax.experimental import pallas as pl
from jax.experimental.pallas import tpu as pltpu


def _stochastic_pool_kernel(x_ref, o_ref, *, pool):
    """One grid step: Cb channel planes (channels on lanes), all-VPU.

    x_ref : (H, W, Cb)     input planes, channels-last
    o_ref : (Ho, Wo, Cb)   output, channels-last
    """
    H, W, cb = x_ref.shape
    ho, wo, _ = o_ref.shape
    hm, wm = H - pool + 1, W - pool + 1       # maxpool (VALID, stride 1) size

    x = x_ref[...]

    # --- MaxPool2d(kernel=pool, stride=1), separable (VPU only):
    # H shifts are leading-axis slices, W shifts are contiguous sublane slices.
    rmax = x[0:hm]
    for di in range(1, pool):
        rmax = jnp.maximum(rmax, x[di:di + hm])          # (hm, W, Cb)
    m = rmax[:, 0:wm]
    for dj in range(1, pool):
        m = jnp.maximum(m, rmax[:, dj:dj + wm])          # (hm, wm, Cb)
    m = m.astype(jnp.float32)                            # f32 accumulation

    # --- ConstantPad2d((0,1,0,1)) + AvgPool2d(k=pool, s=pool, p=pool//2,
    # count_include_pad=True), fused as shift-adds.  All padding is zero and
    # the divisor is constant (pool^2), so out-of-range rows/cols simply drop
    # out of the window sums.
    #
    # Row pass: output row i sums m rows [pool*i - pool//2, +pool) ∩ [0, hm).
    row_sums = []
    for i in range(ho):
        lo = pool * i - (pool // 2)
        lo_c, hi_c = max(lo, 0), min(lo + pool, hm)
        if hi_c > lo_c:
            acc = m[lo_c]                                # (wm, Cb)
            for r in range(lo_c + 1, hi_c):
                acc = acc + m[r]
        else:                                            # window fully in padding
            acc = jnp.zeros((wm, cb), jnp.float32)
        row_sums.append(acc)
    t = jnp.stack(row_sums, axis=0)                      # (ho, wm, Cb)

    # Column pass + scale + store (per output column: <= pool sublane adds).
    inv = 1.0 / float(pool * pool)
    for j in range(wo):
        lo = pool * j - (pool // 2)
        lo_c, hi_c = max(lo, 0), min(lo + pool, wm)
        if hi_c > lo_c:
            s = t[:, lo_c, :]                            # (ho, Cb)
            for c in range(lo_c + 1, hi_c):
                s = s + t[:, c, :]
        else:
            s = jnp.zeros((ho, cb), jnp.float32)
        o_ref[:, j, :] = (s * inv).astype(o_ref.dtype)


def _choose_channel_block(cb_total, H, W, ho, wo, pool, lanes=128):
    """Largest per-step channel block (multiple of 128 lanes) whose
    (8,128)-tile-padded VMEM footprint fits a budget safe on all generations
    (v7x included).  Keeps >=4 grid steps when enough channel tiles exist."""
    def rup(n, m):
        return ((n + m - 1) // m) * m

    hm, wm = H - pool + 1, W - pool + 1

    def step_bytes(cb):
        in_blk = H * rup(W, 8) * cb * 4
        out_blk = ho * rup(wo, 8) * cb * 4
        # live f32 intermediates: rmax, m, row-sum stack (+ slack)
        interm = (hm * rup(W, 8) + hm * rup(wm, 8) + 2 * ho * rup(wm, 8)) * cb * 4
        # 2x double-buffered in/out pipeline copies + one live copy + intermediates
        return 3 * in_blk + 3 * out_blk + interm

    budget = 14 << 20              # conservative: inside v5e/v6e/v7x scoped VMEM
    n_tiles = cb_total // lanes
    # >=4 grid steps when possible (pipelining depth; >=2 steps per v7x TC).
    max_k = max(1, n_tiles // 4) if n_tiles >= 4 else n_tiles
    best = 1
    for k in range(1, max_k + 1):
        if n_tiles % k == 0 and step_bytes(k * lanes) <= budget:
            best = k
    cb = best * lanes
    return cb, step_bytes(cb)


def stochastic_pool2d(x, pool_size=3):
    """Eval-mode forward (maxpool=True, training=False) of StochasticPool2DLayer."""
    pool = int(pool_size)
    N, C, H, W = x.shape
    if H < pool or W < pool:
        raise ValueError(f"spatial dims ({H},{W}) must be >= pool_size ({pool})")

    hm, wm = H - pool + 1, W - pool + 1
    # after ConstantPad2d((0,1,0,1)): (hm+1, wm+1); then AvgPool2d:
    ho = (hm + 1 + 2 * (pool // 2) - pool) // pool + 1
    wo = (wm + 1 + 2 * (pool // 2) - pool) // pool + 1

    nc = N * C
    lanes = 128
    cb_total = ((nc + lanes - 1) // lanes) * lanes       # pad channels to lane multiple

    # channels-last, lane-dense layout: (H, W, nc_padded)
    xl = jnp.transpose(x.reshape(nc, H, W), (1, 2, 0))
    if cb_total != nc:
        xl = jnp.pad(xl, ((0, 0), (0, 0), (0, cb_total - nc)))

    cb, step_bytes = _choose_channel_block(cb_total, H, W, ho, wo, pool, lanes)
    grid = (cb_total // cb,)

    # Scoped-VMEM limit from tile-padded footprints with headroom, capped well
    # below v7x's 64 MiB physical VMEM.
    vmem_limit = int(min(max(2 * step_bytes, 8 << 20), 48 << 20))

    out = pl.pallas_call(
        functools.partial(_stochastic_pool_kernel, pool=pool),
        out_shape=jax.ShapeDtypeStruct((ho, wo, cb_total), x.dtype),
        grid_spec=pltpu.PrefetchScalarGridSpec(
            num_scalar_prefetch=0,
            grid=grid,
            in_specs=[pl.BlockSpec((H, W, cb), lambda g: (0, 0, g))],
            out_specs=pl.BlockSpec((ho, wo, cb), lambda g: (0, 0, g)),
        ),
        compiler_params=pltpu.CompilerParams(
            dimension_semantics=("parallel",),
            vmem_limit_bytes=vmem_limit),
    )(xl)

    out = out[:, :, :nc]                                  # drop channel padding
    return jnp.transpose(out, (2, 0, 1)).reshape(N, C, ho, wo)


def _reference(x, pool=3):
    # Pure-JAX mirror of the PyTorch eval-mode forward (for validation only).
    neg_inf = jnp.array(-jnp.inf, x.dtype)
    zero = jnp.array(0.0, x.dtype)
    m = jax.lax.reduce_window(x, neg_inf, jax.lax.max,
                              (1, 1, pool, pool), (1, 1, 1, 1), 'VALID')
    q = jnp.pad(m, ((0, 0), (0, 0), (0, 1), (0, 1)))                  # ConstantPad2d((0,1,0,1))
    p = jnp.pad(q, ((0, 0), (0, 0),
                    (pool // 2, pool // 2), (pool // 2, pool // 2)))  # AvgPool implicit pad
    s = jax.lax.reduce_window(p, zero, jax.lax.add,
                              (1, 1, pool, pool), (1, 1, pool, pool), 'VALID')
    return s / float(pool * pool)


if __name__ == "__main__":
    key = jax.random.PRNGKey(0)
    x = jax.random.normal(key, (2, 4, 16, 16), dtype=jnp.float32)

    out = stochastic_pool2d(x)
    out = jax.block_until_ready(out)

    ref = _reference(x)
    assert out.shape == (2, 4, 5, 5), out.shape
    assert jnp.allclose(out, ref, atol=1e-4, rtol=1e-4), \
        float(jnp.max(jnp.abs(out - ref)))
    print("KERNEL_OK")
</pallas_src>

<mosaic_0001>
module attributes {stable_mosaic.version = 11 : i64} {
  func.func @_stochastic_pool_kernel(%arg0: i32, %arg1: memref<16x16x128xf32, #tpu.memory_space<vmem>>, %arg2: memref<5x5x128xf32, #tpu.memory_space<vmem>>) attributes {dimension_semantics = [#tpu.dimension_semantics<parallel>], iteration_bounds = array<i64: 1>, scalar_prefetch = 0 : i64, scratch_operands = 0 : i64, tpu.core_type = #tpu.core_type<tc>, window_params = [{transform_indices = @transform_0, window_bounds = array<i64: 16, 16, 128>}, {transform_indices = @transform_1, window_bounds = array<i64: 5, 5, 128>}]} {
    %c0 = arith.constant 0 : index
    %c0_0 = arith.constant 0 : index
    %c0_1 = arith.constant 0 : index
    %0 = vector.load %arg1[%c0, %c0_0, %c0_1] : memref<16x16x128xf32, #tpu.memory_space<vmem>>, vector<16x16x128xf32>
    %1 = vector.extract_strided_slice %0 {offsets = [0, 0, 0], sizes = [14, 16, 128], strides = [1, 1, 1]} : vector<16x16x128xf32> to vector<14x16x128xf32>
    %2 = vector.extract_strided_slice %0 {offsets = [1, 0, 0], sizes = [14, 16, 128], strides = [1, 1, 1]} : vector<16x16x128xf32> to vector<14x16x128xf32>
    %3 = arith.maximumf %1, %2 : vector<14x16x128xf32>
    %4 = vector.extract_strided_slice %0 {offsets = [2, 0, 0], sizes = [14, 16, 128], strides = [1, 1, 1]} : vector<16x16x128xf32> to vector<14x16x128xf32>
    %5 = arith.maximumf %3, %4 : vector<14x16x128xf32>
    %6 = vector.extract_strided_slice %5 {offsets = [0, 0, 0], sizes = [14, 14, 128], strides = [1, 1, 1]} : vector<14x16x128xf32> to vector<14x14x128xf32>
    %7 = vector.extract_strided_slice %5 {offsets = [0, 1, 0], sizes = [14, 14, 128], strides = [1, 1, 1]} : vector<14x16x128xf32> to vector<14x14x128xf32>
    %8 = arith.maximumf %6, %7 : vector<14x14x128xf32>
    %9 = vector.extract_strided_slice %5 {offsets = [0, 2, 0], sizes = [14, 14, 128], strides = [1, 1, 1]} : vector<14x16x128xf32> to vector<14x14x128xf32>
    %10 = arith.maximumf %8, %9 : vector<14x14x128xf32>
    %11 = vector.extract_strided_slice %10 {offsets = [0, 0, 0], sizes = [1, 14, 128], strides = [1, 1, 1]} : vector<14x14x128xf32> to vector<1x14x128xf32>
    %12 = vector.shape_cast %11 : vector<1x14x128xf32> to vector<14x128xf32>
    %13 = vector.extract_strided_slice %10 {offsets = [1, 0, 0], sizes = [1, 14, 128], strides = [1, 1, 1]} : vector<14x14x128xf32> to vector<1x14x128xf32>
    %14 = vector.shape_cast %13 : vector<1x14x128xf32> to vector<14x128xf32>
    %15 = arith.addf %12, %14 : vector<14x128xf32>
    %16 = vector.extract_strided_slice %10 {offsets = [2, 0, 0], sizes = [1, 14, 128], strides = [1, 1, 1]} : vector<14x14x128xf32> to vector<1x14x128xf32>
    %17 = vector.shape_cast %16 : vector<1x14x128xf32> to vector<14x128xf32>
    %18 = vector.extract_strided_slice %10 {offsets = [3, 0, 0], sizes = [1, 14, 128], strides = [1, 1, 1]} : vector<14x14x128xf32> to vector<1x14x128xf32>
    %19 = vector.shape_cast %18 : vector<1x14x128xf32> to vector<14x128xf32>
    %20 = arith.addf %17, %19 : vector<14x128xf32>
    %21 = vector.extract_strided_slice %10 {offsets = [4, 0, 0], sizes = [1, 14, 128], strides = [1, 1, 1]} : vector<14x14x128xf32> to vector<1x14x128xf32>
    %22 = vector.shape_cast %21 : vector<1x14x128xf32> to vector<14x128xf32>
    %23 = arith.addf %20, %22 : vector<14x128xf32>
    %24 = vector.extract_strided_slice %10 {offsets = [5, 0, 0], sizes = [1, 14, 128], strides = [1, 1, 1]} : vector<14x14x128xf32> to vector<1x14x128xf32>
    %25 = vector.shape_cast %24 : vector<1x14x128xf32> to vector<14x128xf32>
    %26 = vector.extract_strided_slice %10 {offsets = [6, 0, 0], sizes = [1, 14, 128], strides = [1, 1, 1]} : vector<14x14x128xf32> to vector<1x14x128xf32>
    %27 = vector.shape_cast %26 : vector<1x14x128xf32> to vector<14x128xf32>
    %28 = arith.addf %25, %27 : vector<14x128xf32>
    %29 = vector.extract_strided_slice %10 {offsets = [7, 0, 0], sizes = [1, 14, 128], strides = [1, 1, 1]} : vector<14x14x128xf32> to vector<1x14x128xf32>
    %30 = vector.shape_cast %29 : vector<1x14x128xf32> to vector<14x128xf32>
    %31 = arith.addf %28, %30 : vector<14x128xf32>
    %32 = vector.extract_strided_slice %10 {offsets = [8, 0, 0], sizes = [1, 14, 128], strides = [1, 1, 1]} : vector<14x14x128xf32> to vector<1x14x128xf32>
    %33 = vector.shape_cast %32 : vector<1x14x128xf32> to vector<14x128xf32>
    %34 = vector.extract_strided_slice %10 {offsets = [9, 0, 0], sizes = [1, 14, 128], strides = [1, 1, 1]} : vector<14x14x128xf32> to vector<1x14x128xf32>
    %35 = vector.shape_cast %34 : vector<1x14x128xf32> to vector<14x128xf32>
    %36 = arith.addf %33, %35 : vector<14x128xf32>
    %37 = vector.extract_strided_slice %10 {offsets = [10, 0, 0], sizes = [1, 14, 128], strides = [1, 1, 1]} : vector<14x14x128xf32> to vector<1x14x128xf32>
    %38 = vector.shape_cast %37 : vector<1x14x128xf32> to vector<14x128xf32>
    %39 = arith.addf %36, %38 : vector<14x128xf32>
    %40 = vector.extract_strided_slice %10 {offsets = [11, 0, 0], sizes = [1, 14, 128], strides = [1, 1, 1]} : vector<14x14x128xf32> to vector<1x14x128xf32>
    %41 = vector.shape_cast %40 : vector<1x14x128xf32> to vector<14x128xf32>
    %42 = vector.extract_strided_slice %10 {offsets = [12, 0, 0], sizes = [1, 14, 128], strides = [1, 1, 1]} : vector<14x14x128xf32> to vector<1x14x128xf32>
    %43 = vector.shape_cast %42 : vector<1x14x128xf32> to vector<14x128xf32>
    %44 = arith.addf %41, %43 : vector<14x128xf32>
    %45 = vector.extract_strided_slice %10 {offsets = [13, 0, 0], sizes = [1, 14, 128], strides = [1, 1, 1]} : vector<14x14x128xf32> to vector<1x14x128xf32>
    %46 = vector.shape_cast %45 : vector<1x14x128xf32> to vector<14x128xf32>
    %47 = arith.addf %44, %46 : vector<14x128xf32>
    %48 = vector.shape_cast %15 : vector<14x128xf32> to vector<1x14x128xf32>
    %49 = vector.shape_cast %23 : vector<14x128xf32> to vector<1x14x128xf32>
    %50 = vector.shape_cast %31 : vector<14x128xf32> to vector<1x14x128xf32>
    %51 = vector.shape_cast %39 : vector<14x128xf32> to vector<1x14x128xf32>
    %52 = vector.shape_cast %47 : vector<14x128xf32> to vector<1x14x128xf32>
    %53 = tpu.concatenate %48, %49, %50, %51, %52 in 0 : vector<1x14x128xf32>, vector<1x14x128xf32>, vector<1x14x128xf32>, vector<1x14x128xf32>, vector<1x14x128xf32> -> vector<5x14x128xf32>
    %54 = vector.extract_strided_slice %53 {offsets = [0, 0, 0], sizes = [5, 1, 128], strides = [1, 1, 1]} : vector<5x14x128xf32> to vector<5x1x128xf32>
    %55 = vector.shape_cast %54 : vector<5x1x128xf32> to vector<5x128xf32>
    %56 = vector.extract_strided_slice %53 {offsets = [0, 1, 0], sizes = [5, 1, 128], strides = [1, 1, 1]} : vector<5x14x128xf32> to vector<5x1x128xf32>
    %57 = vector.shape_cast %56 : vector<5x1x128xf32> to vector<5x128xf32>
    %58 = arith.addf %55, %57 : vector<5x128xf32>
    %cst = arith.constant 0.111111112 : f32
    %59 = vector.broadcast %cst : f32 to vector<5x128xf32>
    %60 = arith.mulf %58, %59 : vector<5x128xf32>
    %c0_2 = arith.constant 0 : index
    %c0_3 = arith.constant 0 : index
    %c0_4 = arith.constant 0 : index
    %61 = vector.load %arg2[%c0_2, %c0_3, %c0_4] : memref<5x5x128xf32, #tpu.memory_space<vmem>>, vector<5x1x128xf32>
    %62 = vector.shape_cast %61 : vector<5x1x128xf32> to vector<5x128xf32>
    %63 = vector.shape_cast %60 : vector<5x128xf32> to vector<5x1x128xf32>
    tpu.vector_store %arg2[%c0_2, %c0_3, %c0_4], %63 {strides = array<i32>} : memref<5x5x128xf32, #tpu.memory_space<vmem>>, vector<5x1x128xf32>,
    %64 = vector.extract_strided_slice %53 {offsets = [0, 2, 0], sizes = [5, 1, 128], strides = [1, 1, 1]} : vector<5x14x128xf32> to vector<5x1x128xf32>
    %65 = vector.shape_cast %64 : vector<5x1x128xf32> to vector<5x128xf32>
    %66 = vector.extract_strided_slice %53 {offsets = [0, 3, 0], sizes = [5, 1, 128], strides = [1, 1, 1]} : vector<5x14x128xf32> to vector<5x1x128xf32>
    %67 = vector.shape_cast %66 : vector<5x1x128xf32> to vector<5x128xf32>
    %68 = arith.addf %65, %67 : vector<5x128xf32>
    %69 = vector.extract_strided_slice %53 {offsets = [0, 4, 0], sizes = [5, 1, 128], strides = [1, 1, 1]} : vector<5x14x128xf32> to vector<5x1x128xf32>
    %70 = vector.shape_cast %69 : vector<5x1x128xf32> to vector<5x128xf32>
    %71 = arith.addf %68, %70 : vector<5x128xf32>
    %cst_5 = arith.constant 0.111111112 : f32
    %72 = vector.broadcast %cst_5 : f32 to vector<5x128xf32>
    %73 = arith.mulf %71, %72 : vector<5x128xf32>
    %c0_6 = arith.constant 0 : index
    %c1 = arith.constant 1 : index
    %c0_7 = arith.constant 0 : index
    %74 = vector.load %arg2[%c0_6, %c1, %c0_7] : memref<5x5x128xf32, #tpu.memory_space<vmem>>, vector<5x1x128xf32>
    %75 = vector.shape_cast %74 : vector<5x1x128xf32> to vector<5x128xf32>
    %76 = vector.shape_cast %73 : vector<5x128xf32> to vector<5x1x128xf32>
    tpu.vector_store %arg2[%c0_6, %c1, %c0_7], %76 {strides = array<i32>} : memref<5x5x128xf32, #tpu.memory_space<vmem>>, vector<5x1x128xf32>,
    %77 = vector.extract_strided_slice %53 {offsets = [0, 5, 0], sizes = [5, 1, 128], strides = [1, 1, 1]} : vector<5x14x128xf32> to vector<5x1x128xf32>
    %78 = vector.shape_cast %77 : vector<5x1x128xf32> to vector<5x128xf32>
    %79 = vector.extract_strided_slice %53 {offsets = [0, 6, 0], sizes = [5, 1, 128], strides = [1, 1, 1]} : vector<5x14x128xf32> to vector<5x1x128xf32>
    %80 = vector.shape_cast %79 : vector<5x1x128xf32> to vector<5x128xf32>
    %81 = arith.addf %78, %80 : vector<5x128xf32>
    %82 = vector.extract_strided_slice %53 {offsets = [0, 7, 0], sizes = [5, 1, 128], strides = [1, 1, 1]} : vector<5x14x128xf32> to vector<5x1x128xf32>
    %83 = vector.shape_cast %82 : vector<5x1x128xf32> to vector<5x128xf32>
    %84 = arith.addf %81, %83 : vector<5x128xf32>
    %cst_8 = arith.constant 0.111111112 : f32
    %85 = vector.broadcast %cst_8 : f32 to vector<5x128xf32>
    %86 = arith.mulf %84, %85 : vector<5x128xf32>
    %c0_9 = arith.constant 0 : index
    %c2 = arith.constant 2 : index
    %c0_10 = arith.constant 0 : index
    %87 = vector.load %arg2[%c0_9, %c2, %c0_10] : memref<5x5x128xf32, #tpu.memory_space<vmem>>, vector<5x1x128xf32>
    %88 = vector.shape_cast %87 : vector<5x1x128xf32> to vector<5x128xf32>
    %89 = vector.shape_cast %86 : vector<5x128xf32> to vector<5x1x128xf32>
    tpu.vector_store %arg2[%c0_9, %c2, %c0_10], %89 {strides = array<i32>} : memref<5x5x128xf32, #tpu.memory_space<vmem>>, vector<5x1x128xf32>,
    %90 = vector.extract_strided_slice %53 {offsets = [0, 8, 0], sizes = [5, 1, 128], strides = [1, 1, 1]} : vector<5x14x128xf32> to vector<5x1x128xf32>
    %91 = vector.shape_cast %90 : vector<5x1x128xf32> to vector<5x128xf32>
    %92 = vector.extract_strided_slice %53 {offsets = [0, 9, 0], sizes = [5, 1, 128], strides = [1, 1, 1]} : vector<5x14x128xf32> to vector<5x1x128xf32>
    %93 = vector.shape_cast %92 : vector<5x1x128xf32> to vector<5x128xf32>
    %94 = arith.addf %91, %93 : vector<5x128xf32>
    %95 = vector.extract_strided_slice %53 {offsets = [0, 10, 0], sizes = [5, 1, 128], strides = [1, 1, 1]} : vector<5x14x128xf32> to vector<5x1x128xf32>
    %96 = vector.shape_cast %95 : vector<5x1x128xf32> to vector<5x128xf32>
    %97 = arith.addf %94, %96 : vector<5x128xf32>
    %cst_11 = arith.constant 0.111111112 : f32
    %98 = vector.broadcast %cst_11 : f32 to vector<5x128xf32>
    %99 = arith.mulf %97, %98 : vector<5x128xf32>
    %c0_12 = arith.constant 0 : index
    %c3 = arith.constant 3 : index
    %c0_13 = arith.constant 0 : index
    %100 = vector.load %arg2[%c0_12, %c3, %c0_13] : memref<5x5x128xf32, #tpu.memory_space<vmem>>, vector<5x1x128xf32>
    %101 = vector.shape_cast %100 : vector<5x1x128xf32> to vector<5x128xf32>
    %102 = vector.shape_cast %99 : vector<5x128xf32> to vector<5x1x128xf32>
    tpu.vector_store %arg2[%c0_12, %c3, %c0_13], %102 {strides = array<i32>} : memref<5x5x128xf32, #tpu.memory_space<vmem>>, vector<5x1x128xf32>,
    %103 = vector.extract_strided_slice %53 {offsets = [0, 11, 0], sizes = [5, 1, 128], strides = [1, 1, 1]} : vector<5x14x128xf32> to vector<5x1x128xf32>
    %104 = vector.shape_cast %103 : vector<5x1x128xf32> to vector<5x128xf32>
    %105 = vector.extract_strided_slice %53 {offsets = [0, 12, 0], sizes = [5, 1, 128], strides = [1, 1, 1]} : vector<5x14x128xf32> to vector<5x1x128xf32>
    %106 = vector.shape_cast %105 : vector<5x1x128xf32> to vector<5x128xf32>
    %107 = arith.addf %104, %106 : vector<5x128xf32>
    %108 = vector.extract_strided_slice %53 {offsets = [0, 13, 0], sizes = [5, 1, 128], strides = [1, 1, 1]} : vector<5x14x128xf32> to vector<5x1x128xf32>
    %109 = vector.shape_cast %108 : vector<5x1x128xf32> to vector<5x128xf32>
    %110 = arith.addf %107, %109 : vector<5x128xf32>
    %cst_14 = arith.constant 0.111111112 : f32
    %111 = vector.broadcast %cst_14 : f32 to vector<5x128xf32>
    %112 = arith.mulf %110, %111 : vector<5x128xf32>
    %c0_15 = arith.constant 0 : index
    %c4 = arith.constant 4 : index
    %c0_16 = arith.constant 0 : index
    %113 = vector.load %arg2[%c0_15, %c4, %c0_16] : memref<5x5x128xf32, #tpu.memory_space<vmem>>, vector<5x1x128xf32>
    %114 = vector.shape_cast %113 : vector<5x1x128xf32> to vector<5x128xf32>
    %115 = vector.shape_cast %112 : vector<5x128xf32> to vector<5x1x128xf32>
    tpu.vector_store %arg2[%c0_15, %c4, %c0_16], %115 {strides = array<i32>} : memref<5x5x128xf32, #tpu.memory_space<vmem>>, vector<5x1x128xf32>,
    return
  }
  func.func @transform_0(%arg0: i32) -> (i32, i32, i32) {
    %c0_i32 = arith.constant 0 : i32
    %c0_i32_0 = arith.constant 0 : i32
    %c0_i32_1 = arith.constant 0 : i32
    return %c0_i32, %c0_i32_0, %arg0 : i32, i32, i32
  }
  func.func @transform_1(%arg0: i32) -> (i32, i32, i32) {
    %c0_i32 = arith.constant 0 : i32
    %c0_i32_0 = arith.constant 0 : i32
    %c0_i32_1 = arith.constant 0 : i32
    return %c0_i32, %c0_i32_0, %arg0 : i32, i32, i32
  }
}

</mosaic_0001>

<llo_original>
// kernel: tpu_custom_call.1
$region0: #{tpu_custom_call.1}
  #allocation0 [shape = 'u32[]', space=smem, size = 0x4, offset = 0x4, fixed_abs, tag = 'smem constant byte address 0x4 - core index']
  #allocation1 [shape = 'u32[144,128]{1,0:T(1,128)}', space=vmem, size = 0x12000, scoped, tag = 'internal scratch']
  %s0 = inlined_call_operand.hbm [shape: f32[16,16,128], index: 0, kind: input, shape index: {}]
  %s1 = inlined_call_operand.hbm [shape: f32[5,5,128], index: 1, kind: output, shape index: {}]
  %s2 = sld [smem:[#allocation0]]
  $region18: #{tpu_custom_call.1} parent=0
    _
  %s4 = ssub.s32 1, %s2
  %s5 = scalar_select 0, %s4, %s2
  $region1: #{tpu_custom_call.1} parent=0
    #allocation2 [shape = 'u8[131072]{0}', space=vmem, size = 0x20000, scoped, tag = 'input window, operand 0, single buffered']
    #allocation3 [shape = 's32[1]{0}', space=sflag, size = 0x4, scoped, tag = 'scoped memory for tpu_custom_call.1']
    #allocation4 [shape = 's32[1]{0}', space=sflag, size = 0x4, scoped, tag = 'scoped memory for tpu_custom_call.1']
    #allocation5 [shape = 'u8[20480]{0}', space=vmem, size = 0x5000, scoped, tag = 'output window, operand 0, single buffered']
    %6 = vsyncpa [#allocation3], 0
    %7 = vsyncpa [#allocation4], 0
    // Predicated region
    $region2: #{tpu_custom_call.1} parent=1 // pred_check
      _
    $region3: #{tpu_custom_call.1} parent=1 // pred_check_branch
      %9 = sbr.rel (0) target = $region5
    $region4: #{tpu_custom_call.1} parent=1 // pred_region
      %s11 = ssub.s32 4096, 4096
      %12 = vsyncadd [#allocation3], %s11
      %s13 = sshll.u32 [#allocation2], 4
      %s14 = int_to_ptr.vmem [resolvable:$true] %s13
      %19 = dma.hbm_to_vmem [thread:$0]  %s0, 4096, %s14, [#allocation3], 128, 128, 8
    $region5: #{tpu_custom_call.1} parent=1 // pred_fallthru
      _
    // Predicated region
    $region6: #{tpu_custom_call.1} parent=1 // pred_check
      _
    $region7: #{tpu_custom_call.1} parent=1 // pred_check_branch
      %21 = sbr.rel (0) target = $region9
    $region8: #{tpu_custom_call.1} parent=1 // pred_region
      %22 = dma.done [#allocation3], 4096
    $region9: #{tpu_custom_call.1} parent=1 // pred_fallthru
      _
    %v23 = vld [vmem:[#allocation2] sm:$0xff]
    %v24 = vld [vmem:[#allocation2 + $0x8] sm:$0xff]
    %v25 = vld [vmem:[#allocation2 + $0x10] sm:$0xff]
    %v26 = vld [vmem:[#allocation2 + $0x18] sm:$0xff]
    %v27 = vld [vmem:[#allocation2 + $0x20] sm:$0xff]
    %v28 = vld [vmem:[#allocation2 + $0x28] sm:$0xff]
    %v29 = vld [vmem:[#allocation2 + $0x30] sm:$0xff]
    %v30 = vld [vmem:[#allocation2 + $0x38] sm:$0xff]
    %v31 = vld [vmem:[#allocation2 + $0x40] sm:$0xff]
    %v32 = vld [vmem:[#allocation2 + $0x48] sm:$0xff]
    %v33 = vld [vmem:[#allocation2 + $0x50] sm:$0xff]
    %v34 = vld [vmem:[#allocation2 + $0x58] sm:$0xff]
    %v35 = vld [vmem:[#allocation2 + $0x60] sm:$0xff]
    %v36 = vld [vmem:[#allocation2 + $0x68] sm:$0xff]
    %v37 = vld [vmem:[#allocation2 + $0x70] sm:$0xff]
    %v38 = vld [vmem:[#allocation2 + $0x78] sm:$0xff]
    %v39 = vld [vmem:[#allocation2 + $0x80] sm:$0xff]
    %v40 = vld [vmem:[#allocation2 + $0x88] sm:$0xff]
    %v41 = vld [vmem:[#allocation2 + $0x90] sm:$0xff]
    %v42 = vld [vmem:[#allocation2 + $0x98] sm:$0xff]
    %v43 = vld [vmem:[#allocation2 + $0xa0] sm:$0xff]
    %v44 = vld [vmem:[#allocation2 + $0xa8] sm:$0xff]
    %v45 = vld [vmem:[#allocation2 + $0xb0] sm:$0xff]
    %v46 = vld [vmem:[#allocation2 + $0xb8] sm:$0xff]
    %v47 = vld [vmem:[#allocation2 + $0xc0] sm:$0xff]
    %v48 = vld [vmem:[#allocation2 + $0xc8] sm:$0xff]
    %v49 = vld [vmem:[#allocation2 + $0xd0] sm:$0xff]
    %v50 = vld [vmem:[#allocation2 + $0xd8] sm:$0xff]
    %v51 = vld [vmem:[#allocation2 + $0xe0] sm:$0xff]
    %v52 = vld [vmem:[#allocation2 + $0xe8] sm:$0xff]
    %v53 = vld [vmem:[#allocation2 + $0xf0] sm:$0xff]
    %v54 = vld [vmem:[#allocation2 + $0xf8] sm:$0xff]
    %v55 = vmax.f32 %v23, %v25
    %v56 = vmax.f32 %v24, %v26
    %v57 = vmax.f32 %v25, %v27
    %v58 = vmax.f32 %v26, %v28
    %v59 = vmax.f32 %v27, %v29
    %v60 = vmax.f32 %v28, %v30
    %v61 = vmax.f32 %v29, %v31
    %v62 = vmax.f32 %v30, %v32
    %v63 = vmax.f32 %v31, %v33
    %v64 = vmax.f32 %v32, %v34
    %v65 = vmax.f32 %v33, %v35
    %v66 = vmax.f32 %v34, %v36
    %v67 = vmax.f32 %v35, %v37
    %v68 = vmax.f32 %v36, %v38
    %v69 = vmax.f32 %v37, %v39
    %v70 = vmax.f32 %v38, %v40
    %v71 = vmax.f32 %v39, %v41
    %v72 = vmax.f32 %v40, %v42
    %v73 = vmax.f32 %v41, %v43
    %v74 = vmax.f32 %v42, %v44
    %v75 = vmax.f32 %v43, %v45
    %v76 = vmax.f32 %v44, %v46
    %v77 = vmax.f32 %v45, %v47
    %v78 = vmax.f32 %v46, %v48
    %v79 = vmax.f32 %v47, %v49
    %v80 = vmax.f32 %v48, %v50
    %v81 = vmax.f32 %v49, %v51
    %v82 = vmax.f32 %v50, %v52
    %v83 = vmax.f32 %v55, %v27
    %v84 = vmax.f32 %v56, %v28
    %v85 = vmax.f32 %v57, %v29
    %v86 = vmax.f32 %v58, %v30
    %v87 = vmax.f32 %v59, %v31
    %v88 = vmax.f32 %v60, %v32
    %v89 = vmax.f32 %v61, %v33
    %v90 = vmax.f32 %v62, %v34
    %v91 = vmax.f32 %v63, %v35
    %v92 = vmax.f32 %v64, %v36
    %v93 = vmax.f32 %v65, %v37
    %v94 = vmax.f32 %v66, %v38
    %v95 = vmax.f32 %v67, %v39
    %v96 = vmax.f32 %v68, %v40
    %v97 = vmax.f32 %v69, %v41
    %v98 = vmax.f32 %v70, %v42
    %v99 = vmax.f32 %v71, %v43
    %v100 = vmax.f32 %v72, %v44
    %v101 = vmax.f32 %v73, %v45
    %v102 = vmax.f32 %v74, %v46
    %v103 = vmax.f32 %v75, %v47
    %v104 = vmax.f32 %v76, %v48
    %v105 = vmax.f32 %v77, %v49
    %v106 = vmax.f32 %v78, %v50
    %v107 = vmax.f32 %v79, %v51
    %v108 = vmax.f32 %v80, %v52
    %v109 = vmax.f32 %v81, %v53
    %v110 = vmax.f32 %v82, %v54
    %vm139 = vcmask 1046528
    %v140 = vrot.slane %v83, 1
    %v141 = vrot.slane %v84, 1
    %v142 = vsel %vm139, %v140, %v141
    %v143 = vrot.slane %v85, 1
    %v144 = vrot.slane %v86, 1
    %v145 = vsel %vm139, %v143, %v144
    %v146 = vrot.slane %v87, 1
    %v147 = vrot.slane %v88, 1
    %v148 = vsel %vm139, %v146, %v147
    %v149 = vrot.slane %v89, 1
    %v150 = vrot.slane %v90, 1
    %v151 = vsel %vm139, %v149, %v150
    %v152 = vrot.slane %v91, 1
    %v153 = vrot.slane %v92, 1
    %v154 = vsel %vm139, %v152, %v153
    %v155 = vrot.slane %v93, 1
    %v156 = vrot.slane %v94, 1
    %v157 = vsel %vm139, %v155, %v156
    %v158 = vrot.slane %v95, 1
    %v159 = vrot.slane %v96, 1
    %v160 = vsel %vm139, %v158, %v159
    %v161 = vrot.slane %v97, 1
    %v162 = vrot.slane %v98, 1
    %v163 = vsel %vm139, %v161, %v162
    %v164 = vrot.slane %v99, 1
    %v165 = vrot.slane %v100, 1
    %v166 = vsel %vm139, %v164, %v165
    %v167 = vrot.slane %v101, 1
    %v168 = vrot.slane %v102, 1
    %v169 = vsel %vm139, %v167, %v168
    %v170 = vrot.slane %v103, 1
    %v171 = vrot.slane %v104, 1
    %v172 = vsel %vm139, %v170, %v171
    %v173 = vrot.slane %v105, 1
    %v174 = vrot.slane %v106, 1
    %v175 = vsel %vm139, %v173, %v174
    %v176 = vrot.slane %v107, 1
    %v177 = vrot.slane %v108, 1
    %v178 = vsel %vm139, %v176, %v177
    %v179 = vrot.slane %v109, 1
    %v180 = vrot.slane %v110, 1
    %v181 = vsel %vm139, %v179, %v180
    %v210 = vmax.f32 %v83, %v142
    %v211 = vmax.f32 %v84, %v141
    %v212 = vmax.f32 %v85, %v145
    %v213 = vmax.f32 %v86, %v144
    %v214 = vmax.f32 %v87, %v148
    %v215 = vmax.f32 %v88, %v147
    %v216 = vmax.f32 %v89, %v151
    %v217 = vmax.f32 %v90, %v150
    %v218 = vmax.f32 %v91, %v154
    %v219 = vmax.f32 %v92, %v153
    %v220 = vmax.f32 %v93, %v157
    %v221 = vmax.f32 %v94, %v156
    %v222 = vmax.f32 %v95, %v160
    %v223 = vmax.f32 %v96, %v159
    %v224 = vmax.f32 %v97, %v163
    %v225 = vmax.f32 %v98, %v162
    %v226 = vmax.f32 %v99, %v166
    %v227 = vmax.f32 %v100, %v165
    %v228 = vmax.f32 %v101, %v169
    %v229 = vmax.f32 %v102, %v168
    %v230 = vmax.f32 %v103, %v172
    %v231 = vmax.f32 %v104, %v171
    %v232 = vmax.f32 %v105, %v175
    %v233 = vmax.f32 %v106, %v174
    %v234 = vmax.f32 %v107, %v178
    %v235 = vmax.f32 %v108, %v177
    %v236 = vmax.f32 %v109, %v181
    %v237 = vmax.f32 %v110, %v180
    %vm238 = vcmask 1045504
    %v239 = vrot.slane %v83, 2
    %v240 = vrot.slane %v84, 2
    %v241 = vsel %vm238, %v239, %v240
    %v242 = vrot.slane %v85, 2
    %v243 = vrot.slane %v86, 2
    %v244 = vsel %vm238, %v242, %v243
    %v245 = vrot.slane %v87, 2
    %v246 = vrot.slane %v88, 2
    %v247 = vsel %vm238, %v245, %v246
    %v248 = vrot.slane %v89, 2
    %v249 = vrot.slane %v90, 2
    %v250 = vsel %vm238, %v248, %v249
    %v251 = vrot.slane %v91, 2
    %v252 = vrot.slane %v92, 2
    %v253 = vsel %vm238, %v251, %v252
    %v254 = vrot.slane %v93, 2
    %v255 = vrot.slane %v94, 2
    %v256 = vsel %vm238, %v254, %v255
    %v257 = vrot.slane %v95, 2
    %v258 = vrot.slane %v96, 2
    %v259 = vsel %vm238, %v257, %v258
    %v260 = vrot.slane %v97, 2
    %v261 = vrot.slane %v98, 2
    %v262 = vsel %vm238, %v260, %v261
    %v263 = vrot.slane %v99, 2
    %v264 = vrot.slane %v100, 2
    %v265 = vsel %vm238, %v263, %v264
    %v266 = vrot.slane %v101, 2
    %v267 = vrot.slane %v102, 2
    %v268 = vsel %vm238, %v266, %v267
    %v269 = vrot.slane %v103, 2
    %v270 = vrot.slane %v104, 2
    %v271 = vsel %vm238, %v269, %v270
    %v272 = vrot.slane %v105, 2
    %v273 = vrot.slane %v106, 2
    %v274 = vsel %vm238, %v272, %v273
    %v275 = vrot.slane %v107, 2
    %v276 = vrot.slane %v108, 2
    %v277 = vsel %vm238, %v275, %v276
    %v278 = vrot.slane %v109, 2
    %v279 = vrot.slane %v110, 2
    %v280 = vsel %vm238, %v278, %v279
    %v309 = vmax.f32 %v210, %v241
    %v310 = vmax.f32 %v211, %v240
    %v311 = vmax.f32 %v212, %v244
    %v312 = vmax.f32 %v213, %v243
    %v313 = vmax.f32 %v214, %v247
    %v314 = vmax.f32 %v215, %v246
    %v315 = vmax.f32 %v216, %v250
    %v316 = vmax.f32 %v217, %v249
    %v317 = vmax.f32 %v218, %v253
    %v318 = vmax.f32 %v219, %v252
    %v319 = vmax.f32 %v220, %v256
    %v320 = vmax.f32 %v221, %v255
    %v321 = vmax.f32 %v222, %v259
    %v322 = vmax.f32 %v223, %v258
    %v323 = vmax.f32 %v224, %v262
    %v324 = vmax.f32 %v225, %v261
    %v325 = vmax.f32 %v226, %v265
    %v326 = vmax.f32 %v227, %v264
    %v327 = vmax.f32 %v228, %v268
    %v328 = vmax.f32 %v229, %v267
    %v329 = vmax.f32 %v230, %v271
    %v330 = vmax.f32 %v231, %v270
    %v331 = vmax.f32 %v232, %v274
    %v332 = vmax.f32 %v233, %v273
    %v333 = vmax.f32 %v234, %v277
    %v334 = vmax.f32 %v235, %v276
    %v335 = vmax.f32 %v236, %v280
    %v336 = vmax.f32 %v237, %v279
    %v337 = vadd.f32 %v309, %v311
    %v338 = vadd.f32 %v310, %v312
    %v339 = vadd.f32 %v313, %v315
    %v340 = vadd.f32 %v314, %v316
    %v341 = vadd.f32 %v339, %v317
    %v342 = vadd.f32 %v340, %v318
    %v343 = vadd.f32 %v319, %v321
    %v344 = vadd.f32 %v320, %v322
    %v345 = vadd.f32 %v343, %v323
    %v346 = vadd.f32 %v344, %v324
    %v347 = vadd.f32 %v325, %v327
    %v348 = vadd.f32 %v326, %v328
    %v349 = vadd.f32 %v347, %v329
    %v350 = vadd.f32 %v348, %v330
    %v351 = vadd.f32 %v331, %v333
    %v352 = vadd.f32 %v332, %v334
    %v353 = vadd.f32 %v351, %v335
    %v354 = vadd.f32 %v352, %v336
    %v360 = vrot.slane %v337, 1
    %v361 = vrot.slane %v341, 1
    %v362 = vrot.slane %v345, 1
    %v363 = vrot.slane %v349, 1
    %v364 = vrot.slane %v353, 1
    %v370 = vadd.f32 %v337, %v360
    %v371 = vadd.f32 %v341, %v361
    %v372 = vadd.f32 %v345, %v362
    %v373 = vadd.f32 %v349, %v363
    %v374 = vadd.f32 %v353, %v364
    %v375 = vmul.f32 %v370, 0.11111111
    %v376 = vmul.f32 %v371, 0.11111111
    %v377 = vmul.f32 %v372, 0.11111111
    %v378 = vmul.f32 %v373, 0.11111111
    %v379 = vmul.f32 %v374, 0.11111111
    %380 = vst [vmem:[#allocation5] sm:$0x1] %v375
    %381 = vst [vmem:[#allocation5 + $0x8] sm:$0x1] %v376
    %382 = vst [vmem:[#allocation5 + $0x10] sm:$0x1] %v377
    %383 = vst [vmem:[#allocation5 + $0x18] sm:$0x1] %v378
    %384 = vst [vmem:[#allocation5 + $0x20] sm:$0x1] %v379
    %v385 = vrot.slane %v337, 2
    %v386 = vrot.slane %v341, 2
    %v387 = vrot.slane %v345, 2
    %v388 = vrot.slane %v349, 2
    %v389 = vrot.slane %v353, 2
    %v395 = vadd.f32 %v370, %v385
    %v396 = vadd.f32 %v371, %v386
    %v397 = vadd.f32 %v372, %v387
    %v398 = vadd.f32 %v373, %v388
    %v399 = vadd.f32 %v374, %v389
    %v400 = vmul.f32 %v395, 0.11111111
    %v401 = vmul.f32 %v396, 0.11111111
    %v402 = vmul.f32 %v397, 0.11111111
    %v403 = vmul.f32 %v398, 0.11111111
    %v404 = vmul.f32 %v399, 0.11111111
    %405 = vst [vmem:[#allocation5 - $0x1] sm:$0x4] %v400
    %406 = vst [vmem:[#allocation5 + $0x7] sm:$0x4] %v401
    %407 = vst [vmem:[#allocation5 + $0xf] sm:$0x4] %v402
    %408 = vst [vmem:[#allocation5 + $0x17] sm:$0x4] %v403
    %409 = vst [vmem:[#allocation5 + $0x1f] sm:$0x4] %v404
    %410 = vst [vmem:[#allocation5 - $0x3] sm:$0x20] %v400
    %411 = vst [vmem:[#allocation5 + $0x5] sm:$0x20] %v401
    %412 = vst [vmem:[#allocation5 + $0xd] sm:$0x20] %v402
    %413 = vst [vmem:[#allocation5 + $0x15] sm:$0x20] %v403
    %414 = vst [vmem:[#allocation5 + $0x1d] sm:$0x20] %v404
    %v420 = vrot.slane %v338, 1
    %v421 = vrot.slane %v342, 1
    %v422 = vrot.slane %v346, 1
    %v423 = vrot.slane %v350, 1
    %v424 = vrot.slane %v354, 1
    %v430 = vadd.f32 %v338, %v420
    %v431 = vadd.f32 %v342, %v421
    %v432 = vadd.f32 %v346, %v422
    %v433 = vadd.f32 %v350, %v423
    %v434 = vadd.f32 %v354, %v424
    %v435 = vrot.slane %v338, 2
    %v436 = vrot.slane %v342, 2
    %v437 = vrot.slane %v346, 2
    %v438 = vrot.slane %v350, 2
    %v439 = vrot.slane %v354, 2
    %v445 = vadd.f32 %v430, %v435
    %v446 = vadd.f32 %v431, %v436
    %v447 = vadd.f32 %v432, %v437
    %v448 = vadd.f32 %v433, %v438
    %v449 = vadd.f32 %v434, %v439
    %v450 = vmul.f32 %v445, 0.11111111
    %v451 = vmul.f32 %v446, 0.11111111
    %v452 = vmul.f32 %v447, 0.11111111
    %v453 = vmul.f32 %v448, 0.11111111
    %v454 = vmul.f32 %v449, 0.11111111
    %455 = vst [vmem:[#allocation5 + $0x3] sm:$0x1] %v450
    %456 = vst [vmem:[#allocation5 + $0xb] sm:$0x1] %v451
    %457 = vst [vmem:[#allocation5 + $0x13] sm:$0x1] %v452
    %458 = vst [vmem:[#allocation5 + $0x1b] sm:$0x1] %v453
    %459 = vst [vmem:[#allocation5 + $0x23] sm:$0x1] %v454
    %460 = vst [vmem:[#allocation5 + $0x1] sm:$0x8] %v450
    %461 = vst [vmem:[#allocation5 + $0x9] sm:$0x8] %v451
    %462 = vst [vmem:[#allocation5 + $0x11] sm:$0x8] %v452
    %463 = vst [vmem:[#allocation5 + $0x19] sm:$0x8] %v453
    %464 = vst [vmem:[#allocation5 + $0x21] sm:$0x8] %v454
    // Predicated region
    $region10: #{tpu_custom_call.1} parent=1 // pred_check
      _
    $region11: #{tpu_custom_call.1} parent=1 // pred_check_branch
      %466 = sbr.rel (0) target = $region13
    $region12: #{tpu_custom_call.1} parent=1 // pred_region
      %s468 = ssub.s32 640, 640
      %469 = vsyncadd [#allocation4], %s468
      %s470 = sshll.u32 [#allocation5], 4
      %s471 = int_to_ptr.vmem [resolvable:$true] %s470
      %476 = dma.vmem_to_hbm [thread:$0]  %s471, 640, %s1, [#allocation4], 128, 128, 8
    $region13: #{tpu_custom_call.1} parent=1 // pred_fallthru
      _
    // Predicated region
    $region14: #{tpu_custom_call.1} parent=1 // pred_check
      _
    $region15: #{tpu_custom_call.1} parent=1 // pred_check_branch
      %478 = sbr.rel (0) target = $region17
    $region16: #{tpu_custom_call.1} parent=1 // pred_region
      %479 = dma.done [#allocation4], 640
    $region17: #{tpu_custom_call.1} parent=1 // pred_fallthru
      _
    %480 = vsyncpa [#allocation3], 1
    %481 = vsyncpa [#allocation4], 1

</llo_original>
